<compile_context>
chip_gen: v5e
topology: v5e:2x2
jax: 0.10.0
libtpu: 0.0.40
codegen_flags: <defaults>
</compile_context>

<pallas_src>
import jax
import jax.numpy as jnp
from jax.experimental import pallas as pl
from jax.experimental.pallas import tpu as pltpu


def _make_rmsnorm_kernel(eps, inv_hidden, x_dtype):
    """Kernel factory; closes over trace-time constants."""
    x_is_f32 = jnp.dtype(x_dtype) == jnp.dtype(jnp.float32)

    def kernel(x_ref, scale_ref, o_ref):
        # Upcast to f32 for the reduction (matches x.float() in PyTorch).
        x_f32 = x_ref[...].astype(jnp.float32)
        # mean(x^2) as sum(x^2) * (1/hidden): scalar-constant multiply instead
        # of a per-row divide.
        mean_sq = jnp.sum(x_f32 * x_f32, axis=-1, keepdims=True) * inv_hidden
        inv_rms = jax.lax.rsqrt(mean_sq + eps)  # EUP slot -- effectively free
        x_normed = x_f32 * inv_rms
        if not x_is_f32:
            # PyTorch .type_as(x): round the normalized value back to the
            # input dtype.  The f32 scale multiply below promotes it back up,
            # so no explicit re-upcast is needed (saves one VPU op/element).
            x_normed = x_normed.astype(x_dtype)
        # scale_ref is pre-cast to f32 in the wrapper (grid-resident block).
        out = x_normed * scale_ref[...]
        o_ref[...] = out.astype(o_ref.dtype)

    return kernel


def _sublane_multiple(*dtypes):
    """Row-tile alignment: 8 for 32-bit, 16 for 16-bit, 32 for 8-bit dtypes."""
    min_bytes = min(jnp.dtype(dt).itemsize for dt in dtypes)
    return max(8, 32 // max(min_bytes, 1))


def _vmem_capacity_bytes():
    """Physical VMEM per TensorCore; conservative fallback if query fails."""
    try:
        info = pltpu.get_tpu_info()
        cap = getattr(info, "vmem_capacity_bytes", None)
        if cap:
            return int(cap)
    except Exception:
        pass
    return 64 << 20  # v7x-sized fallback (safe lower bound for current parts)


def rms_norm(x, scale, eps=1e-5, *, out_dtype=None, tile_target_bytes=8 << 20):
    """RMSNorm over the last axis of `x`, scaled by `scale` (shape = x.shape[-1:]).

    out_dtype: optional override of the output dtype.  Default follows PyTorch
    type promotion of (x_normed.dtype == x.dtype, scale.dtype); pass x.dtype to
    halve output traffic for bf16 x + f32 scale if strict parity is not needed.
    """
    orig_shape = x.shape
    hidden = orig_shape[-1]
    assert scale.shape == (hidden,), (scale.shape, hidden)

    x2d = x.reshape(-1, hidden)
    rows = x2d.shape[0]

    # Output dtype follows PyTorch type promotion of (x_normed.dtype, scale.dtype)
    # unless overridden.
    if out_dtype is None:
        out_dtype = jnp.promote_types(x.dtype, scale.dtype)

    in_bytes = jnp.dtype(x.dtype).itemsize
    out_bytes = jnp.dtype(out_dtype).itemsize
    sublane = _sublane_multiple(x.dtype, out_dtype)

    # ---- VMEM-aware tile sizing -------------------------------------------
    vmem_cap = _vmem_capacity_bytes()
    # Budget for tile buffers + in-kernel f32 intermediates; scoped limit with
    # headroom on top.  ~35/48 MiB on 64 MiB parts (v7x), ~70/96 MiB on
    # 128 MiB parts (v5e/v6e).
    tile_budget_bytes = int(vmem_cap * 0.55)
    vmem_limit = int(vmem_cap * 0.75)

    # Per-row VMEM footprint at a given row tile:
    #   input  tile: double-buffered
    #   output tile: double-buffered
    #   f32 intermediates (x_f32, normalized product): ~2 x hidden x 4 B,
    #   single-buffered (live only during compute)
    per_row_bytes = 2 * hidden * in_bytes + 2 * hidden * out_bytes + 2 * hidden * 4
    budget_max_rows = max(sublane,
                          (tile_budget_bytes // per_row_bytes) // sublane * sublane)

    # Byte-based target: grow the row tile until the *input* tile is multi-MiB
    # (amortizes the ~0.35 us/step grid overhead; >=85% of HBM roofline).
    rows_for_target = pl.cdiv(tile_target_bytes, hidden * in_bytes)
    rows_for_target = pl.cdiv(rows_for_target, sublane) * sublane

    rows_rounded = pl.cdiv(rows, sublane) * sublane
    row_tile = min(budget_max_rows, rows_for_target, rows_rounded)

    # Megacore (v7x, 2 TC/chip): if everything landed in a single grid step but
    # the input is still multi-MiB, split the row axis so the "parallel" grid
    # axis has work for both cores.  No-op on 1-TC parts and for tiny inputs.
    total_in_bytes = rows * hidden * in_bytes
    if row_tile >= rows_rounded and total_in_bytes > (4 << 20) and rows_rounded >= 2 * sublane:
        row_tile = max(sublane, pl.cdiv(pl.cdiv(rows, 2), sublane) * sublane)

    grid = (pl.cdiv(rows, row_tile),)

    # Scale is a grid-resident (1, hidden) block; cast it to f32 once here so
    # the kernel does not re-cast it every step.
    scale2d = scale.reshape(1, hidden).astype(jnp.float32)

    cost = pl.CostEstimate(
        flops=3 * rows * hidden,            # x*x, row-sum, scale multiply
        transcendentals=rows,               # one rsqrt per row
        bytes_accessed=rows * hidden * (in_bytes + out_bytes) + hidden * 4,
    )

    out = pl.pallas_call(
        _make_rmsnorm_kernel(float(eps), 1.0 / float(hidden), x.dtype),
        out_shape=jax.ShapeDtypeStruct((rows, hidden), out_dtype),
        grid_spec=pltpu.PrefetchScalarGridSpec(
            num_scalar_prefetch=0,
            grid=grid,
            in_specs=[
                pl.BlockSpec((row_tile, hidden), lambda i: (i, 0)),
                pl.BlockSpec((1, hidden), lambda i: (0, 0)),
            ],
            out_specs=pl.BlockSpec((row_tile, hidden), lambda i: (i, 0)),
        ),
        compiler_params=pltpu.CompilerParams(
            dimension_semantics=("parallel",),
            vmem_limit_bytes=vmem_limit,
        ),
        cost_estimate=cost,
    )(x2d, scale2d)

    return out.reshape(orig_shape[:-1] + (hidden,)).astype(out_dtype).reshape(orig_shape)


def rms_norm_ref(x, scale, eps=1e-5):
    """Pure-JAX reference mirroring the PyTorch forward."""
    x_fp32 = x.astype(jnp.float32)
    inv = jax.lax.rsqrt(jnp.mean(x_fp32 * x_fp32, axis=-1, keepdims=True) + eps)
    x_normed = (x_fp32 * inv).astype(x.dtype)
    return x_normed * scale


if __name__ == "__main__":
    key = jax.random.PRNGKey(0)

    # Test 1: small f32 case, module-shaped (batch, seq, hidden).
    batch, seq, hidden = 2, 8, 32
    x = jax.random.normal(key, (batch, seq, hidden), dtype=jnp.float32)
    scale = jnp.ones((hidden,), dtype=jnp.float32)  # torch.ones(normalized_shape)

    out = rms_norm(x, scale, eps=1e-5)
    jax.block_until_ready(out)
    ref = rms_norm_ref(x, scale, eps=1e-5)
    assert out.shape == x.shape
    assert out.dtype == ref.dtype
    assert jnp.allclose(out, ref, atol=1e-5, rtol=1e-5), "f32 mismatch vs reference"

    # Test 2: bf16 input with a row count that is not tile-aligned
    # (exercises the .type_as cast path and the partial last block).
    key2 = jax.random.PRNGKey(1)
    x_bf16 = jax.random.normal(key2, (3, 5, 128), dtype=jnp.bfloat16)
    scale2 = jnp.ones((128,), dtype=jnp.float32)
    out2 = rms_norm(x_bf16, scale2, eps=1e-5)
    jax.block_until_ready(out2)
    ref2 = rms_norm_ref(x_bf16, scale2, eps=1e-5)
    assert out2.shape == x_bf16.shape
    assert out2.dtype == ref2.dtype
    assert jnp.allclose(out2.astype(jnp.float32), ref2.astype(jnp.float32),
                        atol=1e-2, rtol=1e-2), "bf16 mismatch vs reference"

    # Test 3: bf16-out override path (traffic-reduction option), larger rows so
    # the multi-step / megacore-split tiling logic is exercised.
    key3 = jax.random.PRNGKey(2)
    x3 = jax.random.normal(key3, (4, 2048, 512), dtype=jnp.bfloat16)
    scale3 = jnp.ones((512,), dtype=jnp.float32)
    out3 = rms_norm(x3, scale3, eps=1e-5, out_dtype=jnp.bfloat16)
    jax.block_until_ready(out3)
    ref3 = rms_norm_ref(x3, scale3, eps=1e-5).astype(jnp.bfloat16)
    assert out3.shape == x3.shape and out3.dtype == jnp.bfloat16
    assert jnp.allclose(out3.astype(jnp.float32), ref3.astype(jnp.float32),
                        atol=2e-2, rtol=2e-2), "bf16-out mismatch vs reference"

    print("KERNEL_OK")
</pallas_src>

<mosaic_0001>
module attributes {stable_mosaic.version = 11 : i64} {
  func.func @kernel(%arg0: i32, %arg1: memref<16x32xf32, #tpu.memory_space<vmem>>, %arg2: memref<1x32xf32, #tpu.memory_space<vmem>>, %arg3: memref<16x32xf32, #tpu.memory_space<vmem>>) attributes {dimension_semantics = [#tpu.dimension_semantics<parallel>], iteration_bounds = array<i64: 1>, scalar_prefetch = 0 : i64, scratch_operands = 0 : i64, tpu.core_type = #tpu.core_type<tc>, window_params = [{transform_indices = @transform_0, window_bounds = array<i64: 16, 32>}, {pipeline_mode = #tpu.pipeline_mode<synchronous>, transform_indices = @transform_1, window_bounds = array<i64: 1, 32>}, {transform_indices = @transform_2, window_bounds = array<i64: 16, 32>}]} {
    %c0 = arith.constant 0 : index
    %c0_0 = arith.constant 0 : index
    %0 = vector.load %arg1[%c0, %c0_0] : memref<16x32xf32, #tpu.memory_space<vmem>>, vector<16x32xf32>
    %1 = arith.mulf %0, %0 : vector<16x32xf32>
    %cst = arith.constant dense<0.000000e+00> : vector<16xf32>
    %2 = vector.multi_reduction <add>, %1, %cst [1] : vector<16x32xf32> to vector<16xf32>
    %3 = vector.shape_cast %2 : vector<16xf32> to vector<16x1xf32>
    %cst_1 = arith.constant 3.125000e-02 : f32
    %4 = vector.broadcast %cst_1 : f32 to vector<16x1xf32>
    %5 = arith.mulf %3, %4 : vector<16x1xf32>
    %cst_2 = arith.constant 9.99999974E-6 : f32
    %6 = vector.broadcast %cst_2 : f32 to vector<16x1xf32>
    %7 = arith.addf %5, %6 : vector<16x1xf32>
    %8 = math.rsqrt %7 : vector<16x1xf32>
    %9 = vector.broadcast %8 : vector<16x1xf32> to vector<16x32xf32>
    %10 = arith.mulf %0, %9 : vector<16x32xf32>
    %c0_3 = arith.constant 0 : index
    %c0_4 = arith.constant 0 : index
    %11 = vector.load %arg2[%c0_3, %c0_4] : memref<1x32xf32, #tpu.memory_space<vmem>>, vector<1x32xf32>
    %12 = vector.broadcast %11 : vector<1x32xf32> to vector<16x32xf32>
    %13 = arith.mulf %10, %12 : vector<16x32xf32>
    %c0_5 = arith.constant 0 : index
    %c0_6 = arith.constant 0 : index
    %14 = vector.load %arg3[%c0_5, %c0_6] : memref<16x32xf32, #tpu.memory_space<vmem>>, vector<16x32xf32>
    tpu.vector_store %arg3[%c0_5, %c0_6], %13 {strides = array<i32>} : memref<16x32xf32, #tpu.memory_space<vmem>>, vector<16x32xf32>,
    return
  }
  func.func @transform_0(%arg0: i32) -> (i32, i32) {
    %c0_i32 = arith.constant 0 : i32
    %c0_i32_0 = arith.constant 0 : i32
    return %arg0, %c0_i32 : i32, i32
  }
  func.func @transform_1(%arg0: i32) -> (i32, i32) {
    %c0_i32 = arith.constant 0 : i32
    %c0_i32_0 = arith.constant 0 : i32
    %c0_i32_1 = arith.constant 0 : i32
    return %c0_i32, %c0_i32_0 : i32, i32
  }
  func.func @transform_2(%arg0: i32) -> (i32, i32) {
    %c0_i32 = arith.constant 0 : i32
    %c0_i32_0 = arith.constant 0 : i32
    return %arg0, %c0_i32 : i32, i32
  }
}

</mosaic_0001>

<llo_original>
// kernel: tpu_custom_call.1
$region0: #{tpu_custom_call.1}
  #allocation0 [shape = 'u32[]', space=smem, size = 0x4, offset = 0x4, fixed_abs, tag = 'smem constant byte address 0x4 - core index']
  #allocation1 [shape = 'u32[72,128]{1,0:T(1,128)}', space=vmem, size = 0x9000, scoped, tag = 'internal scratch']
  %s0 = inlined_call_operand.hbm [shape: f32[16,32], index: 0, kind: input, shape index: {}]
  %s1 = inlined_call_operand.hbm [shape: f32[1,32], index: 1, kind: input, shape index: {}]
  %s2 = inlined_call_operand.hbm [shape: f32[16,32], index: 2, kind: output, shape index: {}]
  %s3 = sld [smem:[#allocation0]]
  $region26: #{tpu_custom_call.1} parent=0
    _
  %s5 = ssub.s32 1, %s3
  %s6 = scalar_select 0, %s5, %s3
  $region1: #{tpu_custom_call.1} parent=0
    #allocation2 [shape = 'u8[8192]{0}', space=vmem, size = 0x2000, scoped, tag = 'input window, operand 0, single buffered']
    #allocation3 [shape = 's32[1]{0}', space=sflag, size = 0x4, scoped, tag = 'scoped memory for tpu_custom_call.1']
    #allocation4 [shape = 's32[1]{0}', space=sflag, size = 0x4, scoped, tag = 'scoped memory for tpu_custom_call.1']
    #allocation5 [shape = 'u8[512]{0}', space=vmem, size = 0x400, scoped, tag = 'input window, operand 1, single buffered']
    #allocation6 [shape = 's32[1]{0}', space=sflag, size = 0x4, scoped, tag = 'scoped memory for tpu_custom_call.1']
    #allocation7 [shape = 'u8[8192]{0}', space=vmem, size = 0x2000, scoped, tag = 'output window, operand 0, single buffered']
    %7 = vsyncpa [#allocation3], 0
    %8 = vsyncpa [#allocation6], 0
    %9 = vsyncpa [#allocation4], 0
    // Predicated region
    $region2: #{tpu_custom_call.1} parent=1 // pred_check
      _
    $region3: #{tpu_custom_call.1} parent=1 // pred_check_branch
      %11 = sbr.rel (0) target = $region5
    $region4: #{tpu_custom_call.1} parent=1 // pred_region
      %13 = vsyncadd [#allocation3], 0
      %s14 = sshll.u32 %s0, 4
      %s15 = int_to_ptr.hbm [resolvable:$true] %s14
      %s16 = sshll.u32 [#allocation2], 4
      %s17 = int_to_ptr.vmem [resolvable:$true] %s16
      %22 = dma.hbm_to_vmem [thread:$0]  %s15, 256, %s17, [#allocation3], 128, 128, 8
    $region5: #{tpu_custom_call.1} parent=1 // pred_fallthru
      _
    // Predicated region
    $region6: #{tpu_custom_call.1} parent=1 // pred_check
      _
    $region7: #{tpu_custom_call.1} parent=1 // pred_check_branch
      %24 = sbr.rel (0) target = $region9
    $region8: #{tpu_custom_call.1} parent=1 // pred_region
      %26 = vsyncadd [#allocation6], 0
      %s28 = sshll.u32 %s1, 4
      %s29 = int_to_ptr.hbm [resolvable:$true] %s28
      %s30 = sshll.u32 [#allocation5], 4
      %s31 = int_to_ptr.vmem [resolvable:$true] %s30
      %33 = dma.hbm_to_vmem [thread:$0]  %s29, 16, %s31, [#allocation6]
    $region9: #{tpu_custom_call.1} parent=1 // pred_fallthru
      _
    // Predicated region
    $region10: #{tpu_custom_call.1} parent=1 // pred_check
      _
    $region11: #{tpu_custom_call.1} parent=1 // pred_check_branch
      %35 = sbr.rel (0) target = $region13
    $region12: #{tpu_custom_call.1} parent=1 // pred_region
      %37 = dma.done [#allocation3], 256
    $region13: #{tpu_custom_call.1} parent=1 // pred_fallthru
      _
    // Predicated region
    $region14: #{tpu_custom_call.1} parent=1 // pred_check
      _
    $region15: #{tpu_custom_call.1} parent=1 // pred_check_branch
      %39 = sbr.rel (0) target = $region17
    $region16: #{tpu_custom_call.1} parent=1 // pred_region
      %41 = dma.done [#allocation6], 16
    $region17: #{tpu_custom_call.1} parent=1 // pred_fallthru
      _
    %v42 = vld [vmem:[#allocation2] sm:$0xff]
    %v43 = vld [vmem:[#allocation2 + $0x8] sm:$0xff]
    %v44 = vmul.f32 %v42, %v42
    %v45 = vmul.f32 %v43, %v43
    %vm46 = vcmask 261120
    %v47 = vsel %vm46, %v44, 0.0
    %48 = vadd.xlane.f32.xlu0 %v47
    %v49 = vpop.xlane.xlu0 %48
    %v50 = vsel %vm46, %v45, 0.0
    %51 = vadd.xlane.f32.xlu0 %v50
    %v52 = vpop.xlane.xlu0 %51
    %v53 = vmul.f32 %v49, 0.03125
    %v54 = vmul.f32 %v52, 0.03125
    %v55 = vadd.f32 %v53, 1e-05
    %v56 = vadd.f32 %v54, 1e-05
    %v57 = vrsqrt.pop %v55
    %v58 = vmul.f32 %v57, %v55
    %v59 = vmul.f32 %v58, %v57
    %v60 = vmul.f32 0.5, %v59
    %v61 = vsub.f32 1.5, %v60
    %v62 = vmul.f32 %v57, %v61
    %vm63 = vweird.f32 %v55
    %vm64 = vweird.f32 %v57
    %vm65 = vmor %vm63, %vm64
    %v66 = vsel %vm65, %v57, %v62
    %v67 = vrsqrt.pop %v56
    %v68 = vmul.f32 %v67, %v56
    %v69 = vmul.f32 %v68, %v67
    %v70 = vmul.f32 0.5, %v69
    %v71 = vsub.f32 1.5, %v70
    %v72 = vmul.f32 %v67, %v71
    %vm73 = vweird.f32 %v56
    %vm74 = vweird.f32 %v67
    %vm75 = vmor %vm73, %vm74
    %v76 = vsel %vm75, %v67, %v72
    %v77 = vmul.f32 %v42, %v66
    %v78 = vmul.f32 %v43, %v76
    %v79 = vld [vmem:[#allocation5] sm:$0x1]
    %v81 = vperm.slane %v79, 0
    %v83 = vmul.f32 %v77, %v81
    %v84 = vmul.f32 %v78, %v81
    %85 = vst.msk [vmem:[#allocation7] sm:$0xff] %vm46, %v83
    %86 = vst.msk [vmem:[#allocation7 + $0x8] sm:$0xff] %vm46, %v84
    // Predicated region
    $region18: #{tpu_custom_call.1} parent=1 // pred_check
      _
    $region19: #{tpu_custom_call.1} parent=1 // pred_check_branch
      %88 = sbr.rel (0) target = $region21
    $region20: #{tpu_custom_call.1} parent=1 // pred_region
      %90 = vsyncadd [#allocation4], 0
      %s91 = sshll.u32 [#allocation7], 4
      %s92 = int_to_ptr.vmem [resolvable:$true] %s91
      %s93 = sshll.u32 %s2, 4
      %s94 = int_to_ptr.hbm [resolvable:$true] %s93
      %99 = dma.vmem_to_hbm [thread:$0]  %s92, 256, %s94, [#allocation4], 128, 128, 8
    $region21: #{tpu_custom_call.1} parent=1 // pred_fallthru
      _
    // Predicated region
    $region22: #{tpu_custom_call.1} parent=1 // pred_check
      _
    $region23: #{tpu_custom_call.1} parent=1 // pred_check_branch
      %101 = sbr.rel (0) target = $region25
    $region24: #{tpu_custom_call.1} parent=1 // pred_region
      %103 = dma.done [#allocation4], 256
    $region25: #{tpu_custom_call.1} parent=1 // pred_fallthru
      _
    %104 = vsyncpa [#allocation3], 1
    %105 = vsyncpa [#allocation6], 1
    %106 = vsyncpa [#allocation4], 1

</llo_original>
